<compile_context>
chip_gen: v7x
topology: tpu7x:2x2x1
jax: 0.10.0
libtpu: 0.0.40
codegen_flags: <defaults>
</compile_context>

<pallas_src>
import functools

import jax
import jax.numpy as jnp
from jax.experimental import pallas as pl
from jax.experimental.pallas import tpu as pltpu


def _round_up(x, m):
    return ((x + m - 1) // m) * m


def _cdiv(a, b):
    return -(-a // b)


def actor_kernel(x_ref, w1_ref, w2_ref, w3_ref, b1_ref, b2_ref, b3_ref,
                 o_ref, *, max_action):
    # Layer 1: Linear + ReLU (bf16 MXU inputs, f32 accumulate, f32 epilogue).
    x = x_ref[...].astype(jnp.bfloat16)
    h = jnp.dot(x, w1_ref[...], preferred_element_type=jnp.float32)
    h = jnp.maximum(h + b1_ref[...], 0.0)

    # Layer 2: Linear + ReLU.
    h = jnp.dot(h.astype(jnp.bfloat16), w2_ref[...],
                preferred_element_type=jnp.float32)
    h = jnp.maximum(h + b2_ref[...], 0.0)

    # Layer 3: Linear + tanh, scaled by max_action (lane-dense padded output).
    h = jnp.dot(h.astype(jnp.bfloat16), w3_ref[...],
                preferred_element_type=jnp.float32)
    o_ref[...] = (max_action * jnp.tanh(h + b3_ref[...])).astype(o_ref.dtype)


def prepare_actor_params(params):
    """One-time (per param-update) preprocessing, hoisted out of the call path."""
    w1, b1, w2, b2, w3, b3 = params
    action_dim = w3.shape[1]
    a_pad = max(128, _round_up(action_dim, 128))   # lane-dense output width
    w3p = jnp.zeros((w3.shape[0], a_pad), jnp.float32).at[:, :action_dim].set(w3)
    b3p = jnp.zeros((1, a_pad), jnp.float32).at[:, :action_dim].set(b3)
    return dict(
        w1=w1.astype(jnp.bfloat16),
        w2=w2.astype(jnp.bfloat16),
        w3=w3p.astype(jnp.bfloat16),
        b1=b1, b2=b2, b3=b3p,
        action_dim=action_dim, a_pad=a_pad,
    )


def actor_forward(state, prep, max_action, *, block_b=2048):
    """Fused actor MLP: batch-tiled grid, VMEM-resident bf16 weights."""
    B, state_dim = state.shape
    H1 = prep["w1"].shape[1]
    H2 = prep["w2"].shape[1]
    a_pad = prep["a_pad"]
    action_dim = prep["action_dim"]

    # Batch tile: multiple of 16 (bf16 sublane packing), capped at block_b;
    # for large batches force >= 2 grid steps so both v7x cores get work.
    n_steps = _cdiv(B, block_b)
    if B >= 512:
        n_steps = max(n_steps, 2)
    tb = _round_up(_cdiv(B, n_steps), 16)
    grid = (_cdiv(B, tb),)   # ragged last block handled/masked by Pallas

    out_padded = pl.pallas_call(
        functools.partial(actor_kernel, max_action=float(max_action)),
        out_shape=jax.ShapeDtypeStruct((B, a_pad), jnp.bfloat16),
        grid=grid,
        in_specs=[
            # state tile: marches along the batch grid axis (cast in-kernel)
            pl.BlockSpec((tb, state_dim), lambda i: (i, 0)),
            # weights / biases: pinned -> VMEM-resident across all grid steps
            pl.BlockSpec((state_dim, H1), lambda i: (0, 0)),
            pl.BlockSpec((H1, H2), lambda i: (0, 0)),
            pl.BlockSpec((H2, a_pad), lambda i: (0, 0)),
            pl.BlockSpec((1, H1), lambda i: (0, 0)),
            pl.BlockSpec((1, H2), lambda i: (0, 0)),
            pl.BlockSpec((1, a_pad), lambda i: (0, 0)),
        ],
        out_specs=pl.BlockSpec((tb, a_pad), lambda i: (i, 0)),
        compiler_params=pltpu.CompilerParams(
            dimension_semantics=("parallel",)),
    )(state, prep["w1"], prep["w2"], prep["w3"],
      prep["b1"], prep["b2"], prep["b3"])

    # Only the lane padding on the action dimension needs stripping.
    return out_padded[:, :action_dim]


def init_actor_params(key, state_dim, action_dim, hidden_sizes=(256, 256)):
    """Deterministic init mimicking nn.Linear default (uniform +-1/sqrt(fan_in)).

    Weights are returned transposed: (in_features, out_features).
    Biases are returned as (1, out_features).
    """
    dims = [state_dim, hidden_sizes[0], hidden_sizes[1], action_dim]
    params = []
    keys = jax.random.split(key, 6)
    for i in range(3):
        fan_in, fan_out = dims[i], dims[i + 1]
        bound = 1.0 / jnp.sqrt(jnp.asarray(fan_in, jnp.float32))
        w = jax.random.uniform(keys[2 * i], (fan_in, fan_out),
                               minval=-bound, maxval=bound, dtype=jnp.float32)
        b = jax.random.uniform(keys[2 * i + 1], (1, fan_out),
                               minval=-bound, maxval=bound, dtype=jnp.float32)
        params.extend([w, b])
    return tuple(params)


if __name__ == "__main__":
    # Shapes consistent with the module defaults: hidden=[256, 256],
    # modest batch/state/action dims, max_action=2.0.
    batch, state_dim, action_dim = 64, 16, 8
    hidden_sizes = (256, 256)
    max_action = 2.0

    key = jax.random.PRNGKey(0)
    k_state, k_params = jax.random.split(key)

    state = jax.random.normal(k_state, (batch, state_dim), dtype=jnp.float32)
    params = init_actor_params(k_params, state_dim, action_dim, hidden_sizes)

    # Hoisted, once-per-param-update preprocessing (not in the call path).
    prep = prepare_actor_params(params)

    out = actor_forward(state, prep, max_action)
    out = jax.block_until_ready(out)

    # Pure-JAX f32 reference of the same forward pass (kernel uses bf16 matmul
    # inputs/outputs with f32 accumulation, so compare with a modest tolerance).
    w1, b1, w2, b2, w3, b3 = params
    ref = jnp.maximum(state @ w1 + b1, 0.0)
    ref = jnp.maximum(ref @ w2 + b2, 0.0)
    ref = max_action * jnp.tanh(ref @ w3 + b3)

    assert out.shape == (batch, action_dim)
    err = float(jnp.max(jnp.abs(out.astype(jnp.float32) - ref)))
    assert err < 5e-2, err
    print("KERNEL_OK")
</pallas_src>

<mosaic_0001>
module attributes {stable_mosaic.version = 11 : i64} {
  func.func @actor_kernel(%arg0: i32, %arg1: memref<64x16xf32, #tpu.memory_space<vmem>>, %arg2: memref<16x256xbf16, #tpu.memory_space<vmem>>, %arg3: memref<256x256xbf16, #tpu.memory_space<vmem>>, %arg4: memref<256x128xbf16, #tpu.memory_space<vmem>>, %arg5: memref<1x256xf32, #tpu.memory_space<vmem>>, %arg6: memref<1x256xf32, #tpu.memory_space<vmem>>, %arg7: memref<1x128xf32, #tpu.memory_space<vmem>>, %arg8: memref<64x128xbf16, #tpu.memory_space<vmem>>) attributes {dimension_semantics = [#tpu.dimension_semantics<parallel>], iteration_bounds = array<i64: 1>, scalar_prefetch = 0 : i64, scratch_operands = 0 : i64, tpu.core_type = #tpu.core_type<tc>, window_params = [{transform_indices = @transform_0, window_bounds = array<i64: 64, 16>}, {pipeline_mode = #tpu.pipeline_mode<synchronous>, transform_indices = @transform_1, window_bounds = array<i64: 16, 256>}, {pipeline_mode = #tpu.pipeline_mode<synchronous>, transform_indices = @transform_2, window_bounds = array<i64: 256, 256>}, {pipeline_mode = #tpu.pipeline_mode<synchronous>, transform_indices = @transform_3, window_bounds = array<i64: 256, 128>}, {pipeline_mode = #tpu.pipeline_mode<synchronous>, transform_indices = @transform_4, window_bounds = array<i64: 1, 256>}, {pipeline_mode = #tpu.pipeline_mode<synchronous>, transform_indices = @transform_5, window_bounds = array<i64: 1, 256>}, {pipeline_mode = #tpu.pipeline_mode<synchronous>, transform_indices = @transform_6, window_bounds = array<i64: 1, 128>}, {transform_indices = @transform_7, window_bounds = array<i64: 64, 128>}]} {
    %c0 = arith.constant 0 : index
    %c0_0 = arith.constant 0 : index
    %0 = vector.load %arg1[%c0, %c0_0] : memref<64x16xf32, #tpu.memory_space<vmem>>, vector<64x16xf32>
    %1 = arith.truncf %0 : vector<64x16xf32> to vector<64x16xbf16>
    %c0_1 = arith.constant 0 : index
    %c0_2 = arith.constant 0 : index
    %2 = vector.load %arg2[%c0_1, %c0_2] : memref<16x256xbf16, #tpu.memory_space<vmem>>, vector<16x256xbf16>
    %cst = arith.constant dense<0.000000e+00> : vector<64x256xf32>
    %3 = tpu.matmul %1, %2, %cst {dimension_numbers = #tpu.dot_dimension_numbers<[1], [0], [0], [1], [0, 0, 1, 1], [], []>} : vector<64x16xbf16>, vector<16x256xbf16>, vector<64x256xf32> -> vector<64x256xf32>
    %c0_3 = arith.constant 0 : index
    %c0_4 = arith.constant 0 : index
    %4 = vector.load %arg5[%c0_3, %c0_4] : memref<1x256xf32, #tpu.memory_space<vmem>>, vector<1x256xf32>
    %5 = vector.broadcast %4 : vector<1x256xf32> to vector<64x256xf32>
    %6 = arith.addf %3, %5 : vector<64x256xf32>
    %cst_5 = arith.constant 0.000000e+00 : f32
    %7 = vector.broadcast %cst_5 : f32 to vector<64x256xf32>
    %8 = arith.maximumf %6, %7 : vector<64x256xf32>
    %9 = arith.truncf %8 : vector<64x256xf32> to vector<64x256xbf16>
    %c0_6 = arith.constant 0 : index
    %c0_7 = arith.constant 0 : index
    %10 = vector.load %arg3[%c0_6, %c0_7] : memref<256x256xbf16, #tpu.memory_space<vmem>>, vector<256x256xbf16>
    %cst_8 = arith.constant dense<0.000000e+00> : vector<64x256xf32>
    %11 = tpu.matmul %9, %10, %cst_8 {dimension_numbers = #tpu.dot_dimension_numbers<[1], [0], [0], [1], [0, 0, 1, 1], [], []>} : vector<64x256xbf16>, vector<256x256xbf16>, vector<64x256xf32> -> vector<64x256xf32>
    %c0_9 = arith.constant 0 : index
    %c0_10 = arith.constant 0 : index
    %12 = vector.load %arg6[%c0_9, %c0_10] : memref<1x256xf32, #tpu.memory_space<vmem>>, vector<1x256xf32>
    %13 = vector.broadcast %12 : vector<1x256xf32> to vector<64x256xf32>
    %14 = arith.addf %11, %13 : vector<64x256xf32>
    %cst_11 = arith.constant 0.000000e+00 : f32
    %15 = vector.broadcast %cst_11 : f32 to vector<64x256xf32>
    %16 = arith.maximumf %14, %15 : vector<64x256xf32>
    %17 = arith.truncf %16 : vector<64x256xf32> to vector<64x256xbf16>
    %c0_12 = arith.constant 0 : index
    %c0_13 = arith.constant 0 : index
    %18 = vector.load %arg4[%c0_12, %c0_13] : memref<256x128xbf16, #tpu.memory_space<vmem>>, vector<256x128xbf16>
    %cst_14 = arith.constant dense<0.000000e+00> : vector<64x128xf32>
    %19 = tpu.matmul %17, %18, %cst_14 {dimension_numbers = #tpu.dot_dimension_numbers<[1], [0], [0], [1], [0, 0, 1, 1], [], []>} : vector<64x256xbf16>, vector<256x128xbf16>, vector<64x128xf32> -> vector<64x128xf32>
    %c0_15 = arith.constant 0 : index
    %c0_16 = arith.constant 0 : index
    %20 = vector.load %arg7[%c0_15, %c0_16] : memref<1x128xf32, #tpu.memory_space<vmem>>, vector<1x128xf32>
    %21 = vector.broadcast %20 : vector<1x128xf32> to vector<64x128xf32>
    %22 = arith.addf %19, %21 : vector<64x128xf32>
    %23 = math.tanh %22 : vector<64x128xf32>
    %cst_17 = arith.constant 2.000000e+00 : f32
    %24 = vector.broadcast %cst_17 : f32 to vector<64x128xf32>
    %25 = arith.mulf %24, %23 : vector<64x128xf32>
    %26 = arith.truncf %25 : vector<64x128xf32> to vector<64x128xbf16>
    %c0_18 = arith.constant 0 : index
    %c0_19 = arith.constant 0 : index
    %27 = vector.load %arg8[%c0_18, %c0_19] : memref<64x128xbf16, #tpu.memory_space<vmem>>, vector<64x128xbf16>
    tpu.vector_store %arg8[%c0_18, %c0_19], %26 {strides = array<i32>} : memref<64x128xbf16, #tpu.memory_space<vmem>>, vector<64x128xbf16>,
    return
  }
  func.func @transform_0(%arg0: i32) -> (i32, i32) {
    %c0_i32 = arith.constant 0 : i32
    %c0_i32_0 = arith.constant 0 : i32
    return %arg0, %c0_i32 : i32, i32
  }
  func.func @transform_1(%arg0: i32) -> (i32, i32) {
    %c0_i32 = arith.constant 0 : i32
    %c0_i32_0 = arith.constant 0 : i32
    %c0_i32_1 = arith.constant 0 : i32
    return %c0_i32, %c0_i32_0 : i32, i32
  }
  func.func @transform_2(%arg0: i32) -> (i32, i32) {
    %c0_i32 = arith.constant 0 : i32
    %c0_i32_0 = arith.constant 0 : i32
    %c0_i32_1 = arith.constant 0 : i32
    return %c0_i32, %c0_i32_0 : i32, i32
  }
  func.func @transform_3(%arg0: i32) -> (i32, i32) {
    %c0_i32 = arith.constant 0 : i32
    %c0_i32_0 = arith.constant 0 : i32
    %c0_i32_1 = arith.constant 0 : i32
    return %c0_i32, %c0_i32_0 : i32, i32
  }
  func.func @transform_4(%arg0: i32) -> (i32, i32) {
    %c0_i32 = arith.constant 0 : i32
    %c0_i32_0 = arith.constant 0 : i32
    %c0_i32_1 = arith.constant 0 : i32
    return %c0_i32, %c0_i32_0 : i32, i32
  }
  func.func @transform_5(%arg0: i32) -> (i32, i32) {
    %c0_i32 = arith.constant 0 : i32
    %c0_i32_0 = arith.constant 0 : i32
    %c0_i32_1 = arith.constant 0 : i32
    return %c0_i32, %c0_i32_0 : i32, i32
  }
  func.func @transform_6(%arg0: i32) -> (i32, i32) {
    %c0_i32 = arith.constant 0 : i32
    %c0_i32_0 = arith.constant 0 : i32
    %c0_i32_1 = arith.constant 0 : i32
    return %c0_i32, %c0_i32_0 : i32, i32
  }
  func.func @transform_7(%arg0: i32) -> (i32, i32) {
    %c0_i32 = arith.constant 0 : i32
    %c0_i32_0 = arith.constant 0 : i32
    return %arg0, %c0_i32 : i32, i32
  }
}

</mosaic_0001>

<llo_original>
// kernel: tpu_custom_call.1
$region0: #{tpu_custom_call.1}
  #allocation0 [shape = 'u32[]', space=smem, size = 0x4, offset = 0x4, fixed_abs, tag = 'smem constant byte address 0x4 - core index']
  #allocation1 [shape = 'u32[144,128]{1,0:T(1,128)}', space=vmem, size = 0x12000, scoped, tag = 'internal scratch']
  %s0 = inlined_call_operand.vmem [shape: f32[64,16], index: 0, kind: input, shape index: {}]
  %s1 = inlined_call_operand.vmem [shape: bf16[16,256], index: 1, kind: input, shape index: {}]
  %s2 = inlined_call_operand.hbm [shape: bf16[256,256], index: 2, kind: input, shape index: {}]
  %s3 = inlined_call_operand.hbm [shape: bf16[256,128], index: 3, kind: input, shape index: {}]
  %s4 = inlined_call_operand.vmem [shape: f32[1,256], index: 4, kind: input, shape index: {}]
  %s5 = inlined_call_operand.vmem [shape: f32[1,256], index: 5, kind: input, shape index: {}]
  %s6 = inlined_call_operand.vmem [shape: f32[1,128], index: 6, kind: input, shape index: {}]
  %s7 = inlined_call_operand.hbm [shape: bf16[64,128], index: 7, kind: output, shape index: {}]
  %s8 = sld [smem:[#allocation0]]
  $region46: #{tpu_custom_call.1} parent=0
    _
  %s10 = ssub.s32 1, %s8
  %s11 = scalar_select 0, %s10, %s8
  $region1: #{tpu_custom_call.1} parent=0
    #allocation2 [shape = 'u8[131072]{0}', space=vmem, size = 0x20000, scoped, tag = 'input window, operand 2, single buffered']
    #allocation3 [shape = 's32[1]{0}', space=sflag, size = 0x4, scoped, tag = 'scoped memory for tpu_custom_call.1']
    #allocation4 [shape = 's32[1]{0}', space=sflag, size = 0x4, scoped, tag = 'scoped memory for tpu_custom_call.1']
    #allocation5 [shape = 'u8[65536]{0}', space=vmem, size = 0x10000, scoped, tag = 'input window, operand 3, single buffered']
    #allocation6 [shape = 's32[1]{0}', space=sflag, size = 0x4, scoped, tag = 'scoped memory for tpu_custom_call.1']
    #allocation7 [shape = 'u8[16384]{0}', space=vmem, size = 0x4000, scoped, tag = 'output window, operand 0, single buffered']
    %12 = vsyncpa [#allocation3], 0
    %13 = vsyncpa [#allocation6], 0
    %14 = vsyncpa [#allocation4], 0
    // Predicated region
    $region2: #{tpu_custom_call.1} parent=1 // pred_check
      _
    $region3: #{tpu_custom_call.1} parent=1 // pred_check_branch
      %16 = sbr.rel (0) target = $region5
    $region4: #{tpu_custom_call.1} parent=1 // pred_region
      _
    $region5: #{tpu_custom_call.1} parent=1 // pred_fallthru
      _
    // Predicated region
    $region6: #{tpu_custom_call.1} parent=1 // pred_check
      _
    $region7: #{tpu_custom_call.1} parent=1 // pred_check_branch
      %18 = sbr.rel (0) target = $region9
    $region8: #{tpu_custom_call.1} parent=1 // pred_region
      _
    $region9: #{tpu_custom_call.1} parent=1 // pred_fallthru
      _
    // Predicated region
    $region10: #{tpu_custom_call.1} parent=1 // pred_check
      _
    $region11: #{tpu_custom_call.1} parent=1 // pred_check_branch
      %20 = sbr.rel (0) target = $region13
    $region12: #{tpu_custom_call.1} parent=1 // pred_region
      %s22 = ssub.s32 4096, 4096
      %23 = vsyncadd [#allocation3], %s22
      %s24 = sshll.u32 [#allocation2], 4
      %s25 = int_to_ptr.vmem [resolvable:$true] %s24
      %30 = dma.hbm_to_vmem [thread:$0]  %s2, 4096, %s25, [#allocation3], 128, 128, 8
    $region13: #{tpu_custom_call.1} parent=1 // pred_fallthru
      _
    // Predicated region
    $region14: #{tpu_custom_call.1} parent=1 // pred_check
      _
    $region15: #{tpu_custom_call.1} parent=1 // pred_check_branch
      %32 = sbr.rel (0) target = $region17
    $region16: #{tpu_custom_call.1} parent=1 // pred_region
      %s34 = ssub.s32 2048, 2048
      %35 = vsyncadd [#allocation6], %s34
      %s36 = sshll.u32 [#allocation5], 4
      %s37 = int_to_ptr.vmem [resolvable:$true] %s36
      %42 = dma.hbm_to_vmem [thread:$0]  %s3, 2048, %s37, [#allocation6], 64, 64, 4
    $region17: #{tpu_custom_call.1} parent=1 // pred_fallthru
      _
    // Predicated region
    $region18: #{tpu_custom_call.1} parent=1 // pred_check
      _
    $region19: #{tpu_custom_call.1} parent=1 // pred_check_branch
      %44 = sbr.rel (0) target = $region21
    $region20: #{tpu_custom_call.1} parent=1 // pred_region
      _
    $region21: #{tpu_custom_call.1} parent=1 // pred_fallthru
      _
    // Predicated region
    $region22: #{tpu_custom_call.1} parent=1 // pred_check
      _
    $region23: #{tpu_custom_call.1} parent=1 // pred_check_branch
      %46 = sbr.rel (0) target = $region25
    $region24: #{tpu_custom_call.1} parent=1 // pred_region
      _
    $region25: #{tpu_custom_call.1} parent=1 // pred_fallthru
      _
    // Predicated region
    $region26: #{tpu_custom_call.1} parent=1 // pred_check
      _
    $region27: #{tpu_custom_call.1} parent=1 // pred_check_branch
      %48 = sbr.rel (0) target = $region29
    $region28: #{tpu_custom_call.1} parent=1 // pred_region
      _
    $region29: #{tpu_custom_call.1} parent=1 // pred_fallthru
      _
    // Predicated region
    $region30: #{tpu_custom_call.1} parent=1 // pred_check
      _
    $region31: #{tpu_custom_call.1} parent=1 // pred_check_branch
      %50 = sbr.rel (0) target = $region33
    $region32: #{tpu_custom_call.1} parent=1 // pred_region
      %51 = dma.done [#allocation3], 4096
    $region33: #{tpu_custom_call.1} parent=1 // pred_fallthru
      _
    // Predicated region
    $region34: #{tpu_custom_call.1} parent=1 // pred_check
      _
    $region35: #{tpu_custom_call.1} parent=1 // pred_check_branch
      %53 = sbr.rel (0) target = $region37
    $region36: #{tpu_custom_call.1} parent=1 // pred_region
      %54 = dma.done [#allocation6], 2048
    $region37: #{tpu_custom_call.1} parent=1 // pred_fallthru
      _
    %v56 = vld [vmem:[%s0] sm:$0xff]
    %v57 = vld [vmem:[%s0 + $0x8] sm:$0xff]
    %v58 = vld [vmem:[%s0 + $0x10] sm:$0xff]
    %v59 = vld [vmem:[%s0 + $0x18] sm:$0xff]
    %v60 = vld [vmem:[%s0 + $0x20] sm:$0xff]
    %v61 = vld [vmem:[%s0 + $0x28] sm:$0xff]
    %v62 = vld [vmem:[%s0 + $0x30] sm:$0xff]
    %v63 = vld [vmem:[%s0 + $0x38] sm:$0xff]
    %v64 = vpack.c.bf16 %v57, %v56
    %v65 = vpack.c.bf16 %v59, %v58
    %v66 = vpack.c.bf16 %v61, %v60
    %v67 = vpack.c.bf16 %v63, %v62
    %v68 = vld [vmem:[%s1] sm:$0xff]
    %v69 = vld [vmem:[%s1 + $0x8] sm:$0xff]
    %v70 = vld [vmem:[%s4] sm:$0x3]
    %v72 = vlaneseq
    %v73 = vshrl.u32 %v72, 7
    %v74 = vsub.s32 0, %v73
    %v75 = vrot.slane %v70, %v74
    %v76 = vlaneseq
    %v77 = vshrl.u32 %v76, 7
    %v78 = vsub.s32 1, %v77
    %v79 = vrot.slane %v70, %v78
    %v84 = vunpack.c.l.b16 %v68
    %v85 = vunpack.c.h.b16 %v68
    %v86 = vunpack.c.l.b16 %v69
    %v87 = vunpack.c.h.b16 %v69
    %v88 = vpack.c.b16 %v86, %v84
    %v89 = vpack.c.b16 %v87, %v85
    %vm92 = vcmask 130048
    %v94 = vsel %vm92, %v64, 0
    %v97 = vsel %vm92, %v65, 0
    %v100 = vsel %vm92, %v66, 0
    %v103 = vsel %vm92, %v67, 0
    %105 = vmatprep.subr.bf16.mxu0 %v89
    %106 = vmatpush1.bf16.msra.mxu0 %v88
    %107 = vmatprep.subr.bf16.mxu0 0
    %108 = vmatpush1.bf16.msra.mxu0 0
    %109 = vmatprep.subr.bf16.mxu0 0
    %110 = vmatpush1.bf16.msra.mxu0 0
    %111 = vmatprep.subr.bf16.mxu0 0
    %112 = vmatpush1.bf16.msra.mxu0 0
    %113 = vmatprep.subr.bf16.mxu0 0
    %114 = vmatpush1.bf16.msra.mxu0 0
    %115 = vmatprep.subr.bf16.mxu0 0
    %116 = vmatpush1.bf16.msra.mxu0 0
    %117 = vmatprep.subr.bf16.mxu0 0
    %118 = vmatpush1.bf16.msra.mxu0 0
    %119 = vmatprep.subr.bf16.mxu0 0
    %120 = vmatpush1.bf16.msra.mxu0 0
    %121 = vmatprep.subr.bf16.mxu0 0
    %122 = vmatpush1.bf16.msra.mxu0 0
    %123 = vmatprep.subr.bf16.mxu0 0
    %124 = vmatpush1.bf16.msra.mxu0 0
    %125 = vmatprep.subr.bf16.mxu0 0
    %126 = vmatpush1.bf16.msra.mxu0 0
    %127 = vmatprep.subr.bf16.mxu0 0
    %128 = vmatpush1.bf16.msra.mxu0 0
    %129 = vmatprep.subr.bf16.mxu0 0
    %130 = vmatpush1.bf16.msra.mxu0 0
    %131 = vmatprep.subr.bf16.mxu0 0
    %132 = vmatpush1.bf16.msra.mxu0 0
    %133 = vmatprep.subr.bf16.mxu0 0
    %134 = vmatpush1.bf16.msra.mxu0 0
    %135 = vmatprep.subr.bf16.mxu0 0
    %136 = vmatpush1.bf16.msra.mxu0 0
    %137 = vmatprep.mubr.bf16.mxu0 0
    %138 = vmatmul.mubr.bf16.gmra.mrb[0].mxu0 %v94
    %v139 = vpop.f32.mrb[0].mxu0
    %v140 = vadd.f32 %v75, %v139
    %v141 = vpop.f32.mrb[0].mxu0
    %v142 = vadd.f32 %v79, %v141
    %v143 = vpop.f32.mrb[0].mxu0
    %v144 = vadd.f32 %v75, %v143
    %v145 = vpop.f32.mrb[0].mxu0
    %v146 = vadd.f32 %v79, %v145
    %147 = vmatprep.mubr.bf16.mxu0 0
    %148 = vmatmul.mubr.bf16.gmra.mrb[0].mxu0 %v97
    %v149 = vpop.f32.mrb[0].mxu0
    %v150 = vadd.f32 %v75, %v149
    %v151 = vpop.f32.mrb[0].mxu0
    %v152 = vadd.f32 %v79, %v151
    %v153 = vpop.f32.mrb[0].mxu0
    %v154 = vadd.f32 %v75, %v153
    %v155 = vpop.f32.mrb[0].mxu0
    %v156 = vadd.f32 %v79, %v155
    %157 = vmatprep.mubr.bf16.mxu0 0
    %158 = vmatmul.mubr.bf16.gmra.mrb[0].mxu0 %v100
    %v159 = vpop.f32.mrb[0].mxu0
    %v160 = vadd.f32 %v75, %v159
    %v161 = vpop.f32.mrb[0].mxu0
    %v162 = vadd.f32 %v79, %v161
    %v163 = vpop.f32.mrb[0].mxu0
    %v164 = vadd.f32 %v75, %v163
    %v165 = vpop.f32.mrb[0].mxu0
    %v166 = vadd.f32 %v79, %v165
    %167 = vmatprep.mubr.bf16.mxu0 0
    %168 = vmatmul.mubr.bf16.gmra.mrb[0].mxu0 %v103
    %v169 = vpop.f32.mrb[0].mxu0
    %v170 = vadd.f32 %v75, %v169
    %v171 = vpop.f32.mrb[0].mxu0
    %v172 = vadd.f32 %v79, %v171
    %v173 = vpop.f32.mrb[0].mxu0
    %v174 = vadd.f32 %v75, %v173
    %v175 = vpop.f32.mrb[0].mxu0
    %v176 = vadd.f32 %v79, %v175
    %177 = vdwg.mxu0
    %v178 = vmax.f32 %v140, 0.0
    %v179 = vmax.f32 %v142, 0.0
    %v180 = vmax.f32 %v144, 0.0
    %v181 = vmax.f32 %v146, 0.0
    %v182 = vmax.f32 %v150, 0.0
    %v183 = vmax.f32 %v152, 0.0
    %v184 = vmax.f32 %v154, 0.0
    %v185 = vmax.f32 %v156, 0.0
    %v186 = vmax.f32 %v160, 0.0
    %v187 = vmax.f32 %v162, 0.0
    %v188 = vmax.f32 %v164, 0.0
    %v189 = vmax.f32 %v166, 0.0
    %v190 = vmax.f32 %v170, 0.0
    %v191 = vmax.f32 %v172, 0.0
    %v192 = vmax.f32 %v174, 0.0
    %v193 = vmax.f32 %v176, 0.0
    %v194 = vpack.c.bf16 %v180, %v178
    %v195 = vpack.c.bf16 %v181, %v179
    %v196 = vpack.c.bf16 %v184, %v182
    %v197 = vpack.c.bf16 %v185, %v183
    %v198 = vpack.c.bf16 %v188, %v186
    %v199 = vpack.c.bf16 %v189, %v187
    %v200 = vpack.c.bf16 %v192, %v190
    %v201 = vpack.c.bf16 %v193, %v191
    %v202 = vld [vmem:[#allocation2] sm:$0xff]
    %v203 = vld [vmem:[#allocation2 + $0x8] sm:$0xff]
    %v204 = vld [vmem:[#allocation2 + $0x10] sm:$0xff]
    %v205 = vld [vmem:[#allocation2 + $0x18] sm:$0xff]
    %v206 = vld [vmem:[#allocation2 + $0x20] sm:$0xff]
    %v207 = vld [vmem:[#allocation2 + $0x28] sm:$0xff]
    %v208 = vld [vmem:[#allocation2 + $0x30] sm:$0xff]
    %v209 = vld [vmem:[#allocation2 + $0x38] sm:$0xff]
    %v210 = vld [vmem:[#allocation2 + $0x40] sm:$0xff]
    %v211 = vld [vmem:[#allocation2 + $0x48] sm:$0xff]
    %v212 = vld [vmem:[#allocation2 + $0x50] sm:$0xff]
    %v213 = vld [vmem:[#allocation2 + $0x58] sm:$0xff]
    %v214 = vld [vmem:[#allocation2 + $0x60] sm:$0xff]
    %v215 = vld [vmem:[#allocation2 + $0x68] sm:$0xff]
    %v216 = vld [vmem:[#allocation2 + $0x70] sm:$0xff]
    %v217 = vld [vmem:[#allocation2 + $0x78] sm:$0xff]
    %v218 = vld [vmem:[#allocation2 + $0x80] sm:$0xff]
    %v219 = vld [vmem:[#allocation2 + $0x88] sm:$0xff]
    %v220 = vld [vmem:[#allocation2 + $0x90] sm:$0xff]
    %v221 = vld [vmem:[#allocation2 + $0x98] sm:$0xff]
    %v222 = vld [vmem:[#allocation2 + $0xa0] sm:$0xff]
    %v223 = vld [vmem:[#allocation2 + $0xa8] sm:$0xff]
    %v224 = vld [vmem:[#allocation2 + $0xb0] sm:$0xff]
    %v225 = vld [vmem:[#allocation2 + $0xb8] sm:$0xff]
    %v226 = vld [vmem:[#allocation2 + $0xc0] sm:$0xff]
    %v227 = vld [vmem:[#allocation2 + $0xc8] sm:$0xff]
    %v228 = vld [vmem:[#allocation2 + $0xd0] sm:$0xff]
    %v229 = vld [vmem:[#allocation2 + $0xd8] sm:$0xff]
    %v230 = vld [vmem:[#allocation2 + $0xe0] sm:$0xff]
    %v231 = vld [vmem:[#allocation2 + $0xe8] sm:$0xff]
    %v232 = vld [vmem:[#allocation2 + $0xf0] sm:$0xff]
    %v233 = vld [vmem:[#allocation2 + $0xf8] sm:$0xff]
    %v234 = vld [vmem:[%s5] sm:$0x3]
    %v236 = vlaneseq
    %v237 = vshrl.u32 %v236, 7
    %v238 = vsub.s32 0, %v237
    %v239 = vrot.slane %v234, %v238
    %v240 = vlaneseq
    %v241 = vshrl.u32 %v240, 7
    %v242 = vsub.s32 1, %v241
    %v243 = vrot.slane %v234, %v242
    %v278 = vunpack.c.l.b16 %v202
    %v279 = vunpack.c.h.b16 %v202
    %v280 = vunpack.c.l.b16 %v203
    %v281 = vunpack.c.h.b16 %v203
    %v282 = vunpack.c.l.b16 %v204
    %v283 = vunpack.c.h.b16 %v204
    %v284 = vunpack.c.l.b16 %v205
    %v285 = vunpack.c.h.b16 %v205
    %v286 = vunpack.c.l.b16 %v206
    %v287 = vunpack.c.h.b16 %v206
    %v288 = vunpack.c.l.b16 %v207
    %v289 = vunpack.c.h.b16 %v207
    %v290 = vunpack.c.l.b16 %v208
    %v291 = vunpack.c.h.b16 %v208
    %v292 = vunpack.c.l.b16 %v209
    %v293 = vunpack.c.h.b16 %v209
    %v294 = vunpack.c.l.b16 %v210
    %v295 = vunpack.c.h.b16 %v210
    %v296 = vunpack.c.l.b16 %v211
    %v297 = vunpack.c.h.b16 %v211
    %v298 = vunpack.c.l.b16 %v212
    %v299 = vunpack.c.h.b16 %v212
    %v300 = vunpack.c.l.b16 %v213
    %v301 = vunpack.c.h.b16 %v213
    %v302 = vunpack.c.l.b16 %v214
    %v303 = vunpack.c.h.b16 %v214
    %v304 = vunpack.c.l.b16 %v215
    %v305 = vunpack.c.h.b16 %v215
    %v306 = vunpack.c.l.b16 %v216
    %v307 = vunpack.c.h.b16 %v216
    %v308 = vunpack.c.l.b16 %v217
    %v309 = vunpack.c.h.b16 %v217
    %v310 = vunpack.c.l.b16 %v218
    %v311 = vunpack.c.h.b16 %v218
    %v312 = vunpack.c.l.b16 %v219
    %v313 = vunpack.c.h.b16 %v219
    %v314 = vunpack.c.l.b16 %v220
    %v315 = vunpack.c.h.b16 %v220
    %v316 = vunpack.c.l.b16 %v221
    %v317 = vunpack.c.h.b16 %v221
    %v318 = vunpack.c.l.b16 %v222
    %v319 = vunpack.c.h.b16 %v222
    %v320 = vunpack.c.l.b16 %v223
    %v321 = vunpack.c.h.b16 %v223
    %v322 = vunpack.c.l.b16 %v224
    %v323 = vunpack.c.h.b16 %v224
    %v324 = vunpack.c.l.b16 %v225
    %v325 = vunpack.c.h.b16 %v225
    %v326 = vunpack.c.l.b16 %v226
    %v327 = vunpack.c.h.b16 %v226
    %v328 = vunpack.c.l.b16 %v227
    %v329 = vunpack.c.h.b16 %v227
    %v330 = vunpack.c.l.b16 %v228
    %v331 = vunpack.c.h.b16 %v228
    %v332 = vunpack.c.l.b16 %v229
    %v333 = vunpack.c.h.b16 %v229
    %v334 = vunpack.c.l.b16 %v230
    %v335 = vunpack.c.h.b16 %v230
    %v336 = vunpack.c.l.b16 %v231
    %v337 = vunpack.c.h.b16 %v231
    %v338 = vunpack.c.l.b16 %v232
    %v339 = vunpack.c.h.b16 %v232
    %v340 = vunpack.c.l.b16 %v233
    %v341 = vunpack.c.h.b16 %v233
    %v342 = vpack.c.b16 %v280, %v278
    %v343 = vpack.c.b16 %v281, %v279
    %v344 = vpack.c.b16 %v284, %v282
    %v345 = vpack.c.b16 %v285, %v283
    %v346 = vpack.c.b16 %v288, %v286
    %v347 = vpack.c.b16 %v289, %v287
    %v348 = vpack.c.b16 %v292, %v290
    %v349 = vpack.c.b16 %v293, %v291
    %v350 = vpack.c.b16 %v296, %v294
    %v351 = vpack.c.b16 %v297, %v295
    %v352 = vpack.c.b16 %v300, %v298
    %v353 = vpack.c.b16 %v301, %v299
    %v354 = vpack.c.b16 %v304, %v302
    %v355 = vpack.c.b16 %v305, %v303
    %v356 = vpack.c.b16 %v308, %v306
    %v357 = vpack.c.b16 %v309, %v307
    %v358 = vpack.c.b16 %v312, %v310
    %v359 = vpack.c.b16 %v313, %v311
    %v360 = vpack.c.b16 %v316, %v314
    %v361 = vpack.c.b16 %v317, %v315
    %v362 = vpack.c.b16 %v320, %v318
    %v363 = vpack.c.b16 %v321, %v319
    %v364 = vpack.c.b16 %v324, %v322
    %v365 = vpack.c.b16 %v325, %v323
    %v366 = vpack.c.b16 %v328, %v326
    %v367 = vpack.c.b16 %v329, %v327
    %v368 = vpack.c.b16 %v332, %v330
    %v369 = vpack.c.b16 %v333, %v331
    %v370 = vpack.c.b16 %v336, %v334
    %v371 = vpack.c.b16 %v337, %v335
    %v372 = vpack.c.b16 %v340, %v338
    %v373 = vpack.c.b16 %v341, %v339
    %406 = vmatprep.subr.bf16.mxu0 %v343
    %407 = vmatpush1.bf16.msra.mxu0 %v342
    %408 = vmatprep.subr.bf16.mxu0 %v345
    %409 = vmatpush1.bf16.msra.mxu0 %v344
    %410 = vmatprep.subr.bf16.mxu0 %v347
    %411 = vmatpush1.bf16.msra.mxu0 %v346
    %412 = vmatprep.subr.bf16.mxu0 %v349
    %413 = vmatpush1.bf16.msra.mxu0 %v348
    %414 = vmatprep.subr.bf16.mxu0 %v351
    %415 = vmatpush1.bf16.msra.mxu0 %v350
    %416 = vmatprep.subr.bf16.mxu0 %v353
    %417 = vmatpush1.bf16.msra.mxu0 %v352
    %418 = vmatprep.subr.bf16.mxu0 %v355
    %419 = vmatpush1.bf16.msra.mxu0 %v354
    %420 = vmatprep.subr.bf16.mxu0 %v357
    %421 = vmatpush1.bf16.msra.mxu0 %v356
    %422 = vmatprep.subr.bf16.mxu0 %v359
    %423 = vmatpush1.bf16.msra.mxu0 %v358
    %424 = vmatprep.subr.bf16.mxu0 %v361
    %425 = vmatpush1.bf16.msra.mxu0 %v360
    %426 = vmatprep.subr.bf16.mxu0 %v363
    %427 = vmatpush1.bf16.msra.mxu0 %v362
    %428 = vmatprep.subr.bf16.mxu0 %v365
    %429 = vmatpush1.bf16.msra.mxu0 %v364
    %430 = vmatprep.subr.bf16.mxu0 %v367
    %431 = vmatpush1.bf16.msra.mxu0 %v366
    %432 = vmatprep.subr.bf16.mxu0 %v369
    %433 = vmatpush1.bf16.msra.mxu0 %v368
    %434 = vmatprep.subr.bf16.mxu0 %v371
    %435 = vmatpush1.bf16.msra.mxu0 %v370
    %436 = vmatprep.subr.bf16.mxu0 %v373
    %437 = vmatpush1.bf16.msra.mxu0 %v372
    %438 = vmatprep.mubr.bf16.mxu0 %v195
    %439 = vmatmul.mubr.bf16.gmra.mrb[0].mxu0 %v194
    %v440 = vpop.f32.mrb[0].mxu0
    %v441 = vadd.f32 %v239, %v440
    %v442 = vpop.f32.mrb[0].mxu0
    %v443 = vadd.f32 %v243, %v442
    %v444 = vpop.f32.mrb[0].mxu0
    %v445 = vadd.f32 %v239, %v444
    %v446 = vpop.f32.mrb[0].mxu0
    %v447 = vadd.f32 %v243, %v446
    %448 = vmatprep.mubr.bf16.mxu0 %v197
    %449 = vmatmul.mubr.bf16.gmra.mrb[0].mxu0 %v196
    %v450 = vpop.f32.mrb[0].mxu0
    %v451 = vadd.f32 %v239, %v450
    %v452 = vpop.f32.mrb[0].mxu0
    %v453 = vadd.f32 %v243, %v452
    %v454 = vpop.f32.mrb[0].mxu0
    %v455 = vadd.f32 %v239, %v454
    %v456 = vpop.f32.mrb[0].mxu0
    %v457 = vadd.f32 %v243, %v456
    %458 = vmatprep.mubr.bf16.mxu0 %v199
    %459 = vmatmul.mubr.bf16.gmra.mrb[0].mxu0 %v198
    %v460 = vpop.f32.mrb[0].mxu0
    %v461 = vadd.f32 %v239, %v460
    %v462 = vpop.f32.mrb[0].mxu0
    %v463 = vadd.f32 %v243, %v462
    %v464 = vpop.f32.mrb[0].mxu0
    %v465 = vadd.f32 %v239, %v464
    %v466 = vpop.f32.mrb[0].mxu0
    %v467 = vadd.f32 %v243, %v466
    %468 = vmatprep.mubr.bf16.mxu0 %v201
    %469 = vmatmul.mubr.bf16.gmra.mrb[0].mxu0 %v200
    %v470 = vpop.f32.mrb[0].mxu0
    %v471 = vadd.f32 %v239, %v470
    %v472 = vpop.f32.mrb[0].mxu0
    %v473 = vadd.f32 %v243, %v472
    %v474 = vpop.f32.mrb[0].mxu0
    %v475 = vadd.f32 %v239, %v474
    %v476 = vpop.f32.mrb[0].mxu0
    %v477 = vadd.f32 %v243, %v476
    %478 = vdwg.mxu0
    %v479 = vmax.f32 %v441, 0.0
    %v480 = vmax.f32 %v443, 0.0
    %v481 = vmax.f32 %v445, 0.0
    %v482 = vmax.f32 %v447, 0.0
    %v483 = vmax.f32 %v451, 0.0
    %v484 = vmax.f32 %v453, 0.0
    %v485 = vmax.f32 %v455, 0.0
    %v486 = vmax.f32 %v457, 0.0
    %v487 = vmax.f32 %v461, 0.0
    %v488 = vmax.f32 %v463, 0.0
    %v489 = vmax.f32 %v465, 0.0
    %v490 = vmax.f32 %v467, 0.0
    %v491 = vmax.f32 %v471, 0.0
    %v492 = vmax.f32 %v473, 0.0
    %v493 = vmax.f32 %v475, 0.0
    %v494 = vmax.f32 %v477, 0.0
    %v495 = vpack.c.bf16 %v481, %v479
    %v496 = vpack.c.bf16 %v482, %v480
    %v497 = vpack.c.bf16 %v485, %v483
    %v498 = vpack.c.bf16 %v486, %v484
    %v499 = vpack.c.bf16 %v489, %v487
    %v500 = vpack.c.bf16 %v490, %v488
    %v501 = vpack.c.bf16 %v493, %v491
    %v502 = vpack.c.bf16 %v494, %v492
    %v503 = vld [vmem:[#allocation5] sm:$0xf]
    %v504 = vld [vmem:[#allocation5 + $0x4] sm:$0xf]
    %v505 = vld [vmem:[#allocation5 + $0x8] sm:$0xf]
    %v506 = vld [vmem:[#allocation5 + $0xc] sm:$0xf]
    %v507 = vld [vmem:[#allocation5 + $0x10] sm:$0xf]
    %v508 = vld [vmem:[#allocation5 + $0x14] sm:$0xf]
    %v509 = vld [vmem:[#allocation5 + $0x18] sm:$0xf]
    %v510 = vld [vmem:[#allocation5 + $0x1c] sm:$0xf]
    %v511 = vld [vmem:[#allocation5 + $0x20] sm:$0xf]
    %v512 = vld [vmem:[#allocation5 + $0x24] sm:$0xf]
    %v513 = vld [vmem:[#allocation5 + $0x28] sm:$0xf]
    %v514 = vld [vmem:[#allocation5 + $0x2c] sm:$0xf]
    %v515 = vld [vmem:[#allocation5 + $0x30] sm:$0xf]
    %v516 = vld [vmem:[#allocation5 + $0x34] sm:$0xf]
    %v517 = vld [vmem:[#allocation5 + $0x38] sm:$0xf]
    %v518 = vld [vmem:[#allocation5 + $0x3c] sm:$0xf]
    %v519 = vld [vmem:[#allocation5 + $0x40] sm:$0xf]
    %v520 = vld [vmem:[#allocation5 + $0x44] sm:$0xf]
    %v521 = vld [vmem:[#allocation5 + $0x48] sm:$0xf]
    %v522 = vld [vmem:[#allocation5 + $0x4c] sm:$0xf]
    %v523 = vld [vmem:[#allocation5 + $0x50] sm:$0xf]
    %v524 = vld [vmem:[#allocation5 + $0x54] sm:$0xf]
    %v525 = vld [vmem:[#allocation5 + $0x58] sm:$0xf]
    %v526 = vld [vmem:[#allocation5 + $0x5c] sm:$0xf]
    %v527 = vld [vmem:[#allocation5 + $0x60] sm:$0xf]
    %v528 = vld [vmem:[#allocation5 + $0x64] sm:$0xf]
    %v529 = vld [vmem:[#allocation5 + $0x68] sm:$0xf]
    %v530 = vld [vmem:[#allocation5 + $0x6c] sm:$0xf]
    %v531 = vld [vmem:[#allocation5 + $0x70] sm:$0xf]
    %v532 = vld [vmem:[#allocation5 + $0x74] sm:$0xf]
    %v533 = vld [vmem:[#allocation5 + $0x78] sm:$0xf]
    %v534 = vld [vmem:[#allocation5 + $0x7c] sm:$0xf]
    %v535 = vld [vmem:[%s6] sm:$0x1]
    %v537 = vlaneseq
    %v538 = vshrl.u32 %v537, 7
    %v539 = vsub.s32 0, %v538
    %v540 = vrot.slane %v535, %v539
    %v574 = vunpack.c.l.b16 %v503
    %v575 = vunpack.c.l.b16 %v504
    %v576 = vunpack.c.l.b16 %v505
    %v577 = vunpack.c.l.b16 %v506
    %v578 = vunpack.c.l.b16 %v507
    %v579 = vunpack.c.l.b16 %v508
    %v580 = vunpack.c.l.b16 %v509
    %v581 = vunpack.c.l.b16 %v510
    %v582 = vunpack.c.l.b16 %v511
    %v583 = vunpack.c.l.b16 %v512
    %v584 = vunpack.c.l.b16 %v513
    %v585 = vunpack.c.l.b16 %v514
    %v586 = vunpack.c.l.b16 %v515
    %v587 = vunpack.c.l.b16 %v516
    %v588 = vunpack.c.l.b16 %v517
    %v589 = vunpack.c.l.b16 %v518
    %v590 = vunpack.c.l.b16 %v519
    %v591 = vunpack.c.l.b16 %v520
    %v592 = vunpack.c.l.b16 %v521
    %v593 = vunpack.c.l.b16 %v522
    %v594 = vunpack.c.l.b16 %v523
    %v595 = vunpack.c.l.b16 %v524
    %v596 = vunpack.c.l.b16 %v525
    %v597 = vunpack.c.l.b16 %v526
    %v598 = vunpack.c.l.b16 %v527
    %v599 = vunpack.c.l.b16 %v528
    %v600 = vunpack.c.l.b16 %v529
    %v601 = vunpack.c.l.b16 %v530
    %v602 = vunpack.c.l.b16 %v531
    %v603 = vunpack.c.l.b16 %v532
    %v604 = vunpack.c.l.b16 %v533
    %v605 = vunpack.c.l.b16 %v534
    %v606 = vpack.c.b16 %v575, %v574
    %v607 = vpack.c.b16 %v577, %v576
    %v608 = vpack.c.b16 %v579, %v578
    %v609 = vpack.c.b16 %v581, %v580
    %v610 = vpack.c.b16 %v583, %v582
    %v611 = vpack.c.b16 %v585, %v584
    %v612 = vpack.c.b16 %v587, %v586
    %v613 = vpack.c.b16 %v589, %v588
    %v614 = vpack.c.b16 %v591, %v590
    %v615 = vpack.c.b16 %v593, %v592
    %v616 = vpack.c.b16 %v595, %v594
    %v617 = vpack.c.b16 %v597, %v596
    %v618 = vpack.c.b16 %v599, %v598
    %v619 = vpack.c.b16 %v601, %v600
    %v620 = vpack.c.b16 %v603, %v602
    %v621 = vpack.c.b16 %v605, %v604
    %638 = vmatprep.subr.bf16.mxu0 0
    %639 = vmatpush1.bf16.msra.mxu0 %v606
    %640 = vmatprep.subr.bf16.mxu0 0
    %641 = vmatpush1.bf16.msra.mxu0 %v607
    %642 = vmatprep.subr.bf16.mxu0 0
    %643 = vmatpush1.bf16.msra.mxu0 %v608
    %644 = vmatprep.subr.bf16.mxu0 0
    %645 = vmatpush1.bf16.msra.mxu0 %v609
    %646 = vmatprep.subr.bf16.mxu0 0
    %647 = vmatpush1.bf16.msra.mxu0 %v610
    %648 = vmatprep.subr.bf16.mxu0 0
    %649 = vmatpush1.bf16.msra.mxu0 %v611
    %650 = vmatprep.subr.bf16.mxu0 0
    %651 = vmatpush1.bf16.msra.mxu0 %v612
    %652 = vmatprep.subr.bf16.mxu0 0
    %653 = vmatpush1.bf16.msra.mxu0 %v613
    %654 = vmatprep.subr.bf16.mxu0 0
    %655 = vmatpush1.bf16.msra.mxu0 %v614
    %656 = vmatprep.subr.bf16.mxu0 0
    %657 = vmatpush1.bf16.msra.mxu0 %v615
    %658 = vmatprep.subr.bf16.mxu0 0
    %659 = vmatpush1.bf16.msra.mxu0 %v616
    %660 = vmatprep.subr.bf16.mxu0 0
    %661 = vmatpush1.bf16.msra.mxu0 %v617
    %662 = vmatprep.subr.bf16.mxu0 0
    %663 = vmatpush1.bf16.msra.mxu0 %v618
    %664 = vmatprep.subr.bf16.mxu0 0
    %665 = vmatpush1.bf16.msra.mxu0 %v619
    %666 = vmatprep.subr.bf16.mxu0 0
    %667 = vmatpush1.bf16.msra.mxu0 %v620
    %668 = vmatprep.subr.bf16.mxu0 0
    %669 = vmatpush1.bf16.msra.mxu0 %v621
    %670 = vmatprep.mubr.bf16.mxu0 %v496
    %671 = vmatmul.mubr.bf16.gmra.mrb[0].mxu0 %v495
    %v672 = vpop.f32.mrb[0].mxu0
    %v673 = vadd.f32 %v540, %v672
    %v674 = vpop.f32.mrb[0].mxu0
    %v675 = vpop.f32.mrb[0].mxu0
    %v676 = vadd.f32 %v540, %v675
    %v677 = vpop.f32.mrb[0].mxu0
    %678 = vmatprep.mubr.bf16.mxu0 %v498
    %679 = vmatmul.mubr.bf16.gmra.mrb[0].mxu0 %v497
    %v680 = vpop.f32.mrb[0].mxu0
    %v681 = vadd.f32 %v540, %v680
    %v682 = vpop.f32.mrb[0].mxu0
    %v683 = vpop.f32.mrb[0].mxu0
    %v684 = vadd.f32 %v540, %v683
    %v685 = vpop.f32.mrb[0].mxu0
    %686 = vmatprep.mubr.bf16.mxu0 %v500
    %687 = vmatmul.mubr.bf16.gmra.mrb[0].mxu0 %v499
    %v688 = vpop.f32.mrb[0].mxu0
    %v689 = vadd.f32 %v540, %v688
    %v690 = vpop.f32.mrb[0].mxu0
    %v691 = vpop.f32.mrb[0].mxu0
    %v692 = vadd.f32 %v540, %v691
    %v693 = vpop.f32.mrb[0].mxu0
    %694 = vmatprep.mubr.bf16.mxu0 %v502
    %695 = vmatmul.mubr.bf16.gmra.mrb[0].mxu0 %v501
    %v696 = vpop.f32.mrb[0].mxu0
    %v697 = vadd.f32 %v540, %v696
    %v698 = vpop.f32.mrb[0].mxu0
    %v699 = vpop.f32.mrb[0].mxu0
    %v700 = vadd.f32 %v540, %v699
    %v701 = vpop.f32.mrb[0].mxu0
    %702 = vdwg.mxu0
    %v703 = vtanh.pop %v673
    %v704 = vtanh.pop %v676
    %v705 = vtanh.pop %v681
    %v706 = vtanh.pop %v684
    %v707 = vtanh.pop %v689
    %v708 = vtanh.pop %v692
    %v709 = vtanh.pop %v697
    %v710 = vtanh.pop %v700
    %v711 = vmul.f32 %v703, 2.0
    %v712 = vmul.f32 %v704, 2.0
    %v713 = vmul.f32 %v705, 2.0
    %v714 = vmul.f32 %v706, 2.0
    %v715 = vmul.f32 %v707, 2.0
    %v716 = vmul.f32 %v708, 2.0
    %v717 = vmul.f32 %v709, 2.0
    %v718 = vmul.f32 %v710, 2.0
    %v719 = vpack.c.bf16 %v712, %v711
    %v720 = vpack.c.bf16 %v714, %v713
    %v721 = vpack.c.bf16 %v716, %v715
    %v722 = vpack.c.bf16 %v718, %v717
    %v727 = vunpack.c.l.b16 %v719
    %v728 = vunpack.c.h.b16 %v719
    %v729 = vunpack.c.l.b16 %v720
    %v730 = vunpack.c.h.b16 %v720
    %v731 = vunpack.c.l.b16 %v721
    %v732 = vunpack.c.h.b16 %v721
    %v733 = vunpack.c.l.b16 %v722
    %v734 = vunpack.c.h.b16 %v722
    %v735 = vpack.c.b16 %v727, %v727
    %v736 = vpack.c.b16 %v728, %v728
    %v737 = vpack.c.b16 %v729, %v729
    %v738 = vpack.c.b16 %v730, %v730
    %v739 = vpack.c.b16 %v731, %v731
    %v740 = vpack.c.b16 %v732, %v732
    %v741 = vpack.c.b16 %v733, %v733
    %v742 = vpack.c.b16 %v734, %v734
    %751 = vst [vmem:[#allocation7] sm:$0xf] %v735
    %752 = vst [vmem:[#allocation7 + $0x4] sm:$0xf] %v736
    %753 = vst [vmem:[#allocation7 + $0x8] sm:$0xf] %v737
    %754 = vst [vmem:[#allocation7 + $0xc] sm:$0xf] %v738
    %755 = vst [vmem:[#allocation7 + $0x10] sm:$0xf] %v739
    %756 = vst [vmem:[#allocation7 + $0x14] sm:$0xf] %v740
    %757 = vst [vmem:[#allocation7 + $0x18] sm:$0xf] %v741
    %758 = vst [vmem:[#allocation7 + $0x1c] sm:$0xf] %v742
    // Predicated region
    $region38: #{tpu_custom_call.1} parent=1 // pred_check
      _
    $region39: #{tpu_custom_call.1} parent=1 // pred_check_branch
      %760 = sbr.rel (0) target = $region41
    $region40: #{tpu_custom_call.1} parent=1 // pred_region
      %s762 = ssub.s32 512, 512
      %763 = vsyncadd [#allocation4], %s762
      %s764 = sshll.u32 [#allocation7], 4
      %s765 = int_to_ptr.vmem [resolvable:$true] %s764
      %770 = dma.vmem_to_hbm [thread:$0]  %s765, 512, %s7, [#allocation4], 64, 64, 4
    $region41: #{tpu_custom_call.1} parent=1 // pred_fallthru
      _
    // Predicated region
    $region42: #{tpu_custom_call.1} parent=1 // pred_check
      _
    $region43: #{tpu_custom_call.1} parent=1 // pred_check_branch
      %772 = sbr.rel (0) target = $region45
    $region44: #{tpu_custom_call.1} parent=1 // pred_region
      %773 = dma.done [#allocation4], 512
    $region45: #{tpu_custom_call.1} parent=1 // pred_fallthru
      _
    %774 = vsyncpa [#allocation3], 1
    %775 = vsyncpa [#allocation6], 1
    %776 = vsyncpa [#allocation4], 1

</llo_original>
